<compile_context>
chip_gen: v5e
topology: v5e:2x2
jax: 0.10.0
libtpu: 0.0.40
codegen_flags: <defaults>
</compile_context>

<pallas_src>
import jax
import jax.numpy as jnp
import numpy as np
from jax import lax
from jax.experimental import pallas as pl
from jax.experimental.pallas import tpu as pltpu


# ---------------- fake fixed-point truncation (wl=4, fl=0) ----------------
WL = 4
FL = 0


def fake_fixed_truncate(x, wl=WL, fl=FL, _unused=0):
    scale = 2.0 ** fl
    lo = -(2.0 ** (wl - 1)) / scale          # -8.0 for (4, 0)
    hi = (2.0 ** (wl - 1) - 1.0) / scale     #  7.0 for (4, 0)
    return jnp.clip(jnp.floor(x * scale) / scale, lo, hi)


# ------------------------------ Pallas kernel ----------------------------------
def conv3x3_relu_kernel(p_ref, w_ref, b_ref, o_ref):
    # p_ref: (1, K, THW)    bf16 quantized im2col patches, K = 9*Cin
    # w_ref: (Cout, K)      bf16 quantized, flattened weights (kh, kw, cin order)
    # b_ref: (Cout, 1)      f32  quantized bias
    # o_ref: (1, Cout, THW) f32  lane-dense output tile

    # single fused K = 9*Cin bf16 matmul on the MXU, f32 accumulation
    acc = jnp.dot(w_ref[...], p_ref[0], preferred_element_type=jnp.float32)  # (Cout, THW)

    # bias broadcast along the lane axis + ReLU, dense (unmasked) store
    o_ref[0] = jnp.maximum(acc + b_ref[...], 0.0)


# ------------------------------- wrapper ----------------------------------------
def _pick_hw_tile(hw):
    # largest "nice" lane tile dividing H*W (multiple of 256 preferred for v6e/v7x MXU);
    # falls back to full extent (always a legal block) for awkward spatial sizes.
    for t in (2048, 1024, 512, 256):
        if hw % t == 0:
            return t
    return hw


def conv3x3_relu_4_4(x_nchw, weight_oihw, bias_o):
    """x_nchw: (N, Cin, H, W) f32; weight: (Cout, Cin, 3, 3); bias: (Cout,).
    Returns (N, Cout, H, W) f32."""
    N, Cin, H, W = x_nchw.shape
    Cout = weight_oihw.shape[0]
    HW = H * W
    K = 9 * Cin

    # parameter quantization (once per forward); quantized values are integers in
    # [-8, 7] (fl=0) so the bf16 weight cast is exact.
    wq = fake_fixed_truncate(weight_oihw)                                   # (Cout, Cin, 3, 3)
    w_flat = jnp.transpose(wq, (0, 2, 3, 1)).reshape(Cout, K).astype(jnp.bfloat16)
    b2d = fake_fixed_truncate(bias_o).reshape(Cout, 1).astype(jnp.float32)

    # Activation quantization BEFORE im2col (quantize Cin*H*W elements once, not 9x),
    # then pad + im2col in bf16 (exact for the quantized integers).  This halves the
    # HBM footprint / read traffic of the kernel's dominant input vs an f32 im2col.
    xq = fake_fixed_truncate(x_nchw).astype(jnp.bfloat16)                   # (N, Cin, H, W)
    x_pad = jnp.pad(xq, ((0, 0), (0, 0), (1, 1), (1, 1)))
    taps = [x_pad[:, :, kh:kh + H, kw:kw + W]
            for kh in range(3) for kw in range(3)]                          # 9 x (N, Cin, H, W)
    # K-order is (kh, kw, cin), matching w_flat above.
    patches = jnp.stack(taps, axis=1).reshape(N, K, HW)                     # (N, 9*Cin, H*W) bf16

    thw = _pick_hw_tile(HW)
    grid = (N, HW // thw)

    out = pl.pallas_call(
        conv3x3_relu_kernel,
        out_shape=jax.ShapeDtypeStruct((N, Cout, HW), jnp.float32),
        grid_spec=pltpu.PrefetchScalarGridSpec(
            num_scalar_prefetch=0,
            grid=grid,
            in_specs=[
                pl.BlockSpec((1, K, thw), lambda n, t: (n, 0, t)),
                pl.BlockSpec((Cout, K), lambda n, t: (0, 0)),
                pl.BlockSpec((Cout, 1), lambda n, t: (0, 0)),
            ],
            out_specs=pl.BlockSpec((1, Cout, thw), lambda n, t: (n, 0, t)),
        ),
        compiler_params=pltpu.CompilerParams(
            dimension_semantics=("parallel", "parallel")),
    )(patches, w_flat, b2d)

    # row-major reshape (free); result is already NCHW.
    return out.reshape(N, Cout, H, W)


# ------------------------------ reference (plain JAX) ----------------------------
def conv3x3_relu_4_4_ref(x_nchw, weight_oihw, bias_o):
    xq = fake_fixed_truncate(x_nchw)
    wq = fake_fixed_truncate(weight_oihw)
    bq = fake_fixed_truncate(bias_o)
    y = lax.conv_general_dilated(
        xq, wq, window_strides=(1, 1), padding=((1, 1), (1, 1)),
        dimension_numbers=("NCHW", "OIHW", "NCHW"))
    y = y + bq[None, :, None, None]
    return jnp.maximum(y, 0.0)


if __name__ == "__main__":
    N, Cin, Cout, H, W = 2, 4, 8, 16, 16

    key = jax.random.PRNGKey(0)
    kx, kw, kb = jax.random.split(key, 3)

    # deterministic synthetic inputs (PyTorch-like shapes: x NCHW, w (Cout,Cin,3,3), b (Cout,))
    x = jax.random.normal(kx, (N, Cin, H, W), dtype=jnp.float32) * 4.0
    weight = jax.random.uniform(kw, (Cout, Cin, 3, 3),
                                minval=-2.0, maxval=2.0, dtype=jnp.float32)
    bias = jax.random.uniform(kb, (Cout,),
                              minval=-2.0, maxval=2.0, dtype=jnp.float32)

    out = conv3x3_relu_4_4(x, weight, bias)
    out = jax.block_until_ready(out)

    ref = jax.block_until_ready(conv3x3_relu_4_4_ref(x, weight, bias))
    assert out.shape == (N, Cout, H, W), out.shape
    np.testing.assert_allclose(np.asarray(out), np.asarray(ref), rtol=1e-5, atol=1e-5)

    print("KERNEL_OK")
</pallas_src>

<mosaic_0001>
module attributes {stable_mosaic.version = 11 : i64} {
  func.func @conv3x3_relu_kernel(%arg0: i32, %arg1: i32, %arg2: memref<1x36x256xbf16, #tpu.memory_space<vmem>>, %arg3: memref<8x36xbf16, #tpu.memory_space<vmem>>, %arg4: memref<8x1xf32, #tpu.memory_space<vmem>>, %arg5: memref<1x8x256xf32, #tpu.memory_space<vmem>>) attributes {dimension_semantics = [#tpu.dimension_semantics<parallel>, #tpu.dimension_semantics<parallel>], iteration_bounds = array<i64: 2, 1>, scalar_prefetch = 0 : i64, scratch_operands = 0 : i64, tpu.core_type = #tpu.core_type<tc>, window_params = [{transform_indices = @transform_0, window_bounds = array<i64: 1, 36, 256>}, {pipeline_mode = #tpu.pipeline_mode<synchronous>, transform_indices = @transform_1, window_bounds = array<i64: 8, 36>}, {pipeline_mode = #tpu.pipeline_mode<synchronous>, transform_indices = @transform_2, window_bounds = array<i64: 8, 1>}, {transform_indices = @transform_3, window_bounds = array<i64: 1, 8, 256>}]} {
    %c0 = arith.constant 0 : index
    %c0_0 = arith.constant 0 : index
    %0 = vector.load %arg3[%c0, %c0_0] : memref<8x36xbf16, #tpu.memory_space<vmem>>, vector<8x36xbf16>
    %c0_1 = arith.constant 0 : index
    %c0_2 = arith.constant 0 : index
    %c0_3 = arith.constant 0 : index
    %1 = vector.load %arg2[%c0_1, %c0_2, %c0_3] : memref<1x36x256xbf16, #tpu.memory_space<vmem>>, vector<1x36x256xbf16>
    %2 = vector.shape_cast %1 : vector<1x36x256xbf16> to vector<36x256xbf16>
    %cst = arith.constant dense<0.000000e+00> : vector<8x256xf32>
    %3 = tpu.matmul %0, %2, %cst {dimension_numbers = #tpu.dot_dimension_numbers<[1], [0], [0], [1], [0, 0, 1, 1], [], []>} : vector<8x36xbf16>, vector<36x256xbf16>, vector<8x256xf32> -> vector<8x256xf32>
    %c0_4 = arith.constant 0 : index
    %c0_5 = arith.constant 0 : index
    %4 = vector.load %arg4[%c0_4, %c0_5] : memref<8x1xf32, #tpu.memory_space<vmem>>, vector<8x1xf32>
    %5 = vector.broadcast %4 : vector<8x1xf32> to vector<8x256xf32>
    %6 = arith.addf %3, %5 : vector<8x256xf32>
    %cst_6 = arith.constant 0.000000e+00 : f32
    %7 = vector.broadcast %cst_6 : f32 to vector<8x256xf32>
    %8 = arith.maximumf %6, %7 : vector<8x256xf32>
    %c0_7 = arith.constant 0 : index
    %c0_8 = arith.constant 0 : index
    %c0_9 = arith.constant 0 : index
    %9 = vector.load %arg5[%c0_7, %c0_8, %c0_9] : memref<1x8x256xf32, #tpu.memory_space<vmem>>, vector<1x8x256xf32>
    %10 = vector.shape_cast %9 : vector<1x8x256xf32> to vector<8x256xf32>
    %11 = vector.shape_cast %8 : vector<8x256xf32> to vector<1x8x256xf32>
    tpu.vector_store %arg5[%c0_7, %c0_8, %c0_9], %11 {strides = array<i32>} : memref<1x8x256xf32, #tpu.memory_space<vmem>>, vector<1x8x256xf32>,
    return
  }
  func.func @transform_0(%arg0: i32, %arg1: i32) -> (i32, i32, i32) {
    %c0_i32 = arith.constant 0 : i32
    %c0_i32_0 = arith.constant 0 : i32
    return %arg0, %c0_i32, %arg1 : i32, i32, i32
  }
  func.func @transform_1(%arg0: i32, %arg1: i32) -> (i32, i32) {
    %c0_i32 = arith.constant 0 : i32
    %c0_i32_0 = arith.constant 0 : i32
    %c0_i32_1 = arith.constant 0 : i32
    return %c0_i32, %c0_i32_0 : i32, i32
  }
  func.func @transform_2(%arg0: i32, %arg1: i32) -> (i32, i32) {
    %c0_i32 = arith.constant 0 : i32
    %c0_i32_0 = arith.constant 0 : i32
    %c0_i32_1 = arith.constant 0 : i32
    return %c0_i32, %c0_i32_0 : i32, i32
  }
  func.func @transform_3(%arg0: i32, %arg1: i32) -> (i32, i32, i32) {
    %c0_i32 = arith.constant 0 : i32
    %c0_i32_0 = arith.constant 0 : i32
    return %arg0, %c0_i32, %arg1 : i32, i32, i32
  }
}

</mosaic_0001>

<llo_original>
// kernel: tpu_custom_call.1
$region0: #{tpu_custom_call.1}
  #allocation0 [shape = 'u32[]', space=smem, size = 0x4, offset = 0x4, fixed_abs, tag = 'smem constant byte address 0x4 - core index']
  #allocation1 [shape = 'u32[72,128]{1,0:T(1,128)}', space=vmem, size = 0x9000, scoped, tag = 'internal scratch']
  %s0 = inlined_call_operand.vmem [shape: bf16[2,36,256], index: 0, kind: input, shape index: {}]
  %s1 = inlined_call_operand.vmem [shape: bf16[8,36], index: 1, kind: input, shape index: {}]
  %s2 = inlined_call_operand.vmem [shape: f32[8,1], index: 2, kind: input, shape index: {}]
  %s3 = inlined_call_operand.hbm [shape: f32[2,8,256], index: 3, kind: output, shape index: {}]
  %s4 = sld [smem:[#allocation0]]
  $region45: #{tpu_custom_call.1} parent=0
    _
  %s6 = ssub.s32 1, %s4
  %s7 = scalar_select 0, %s6, %s4
  $region1: #{tpu_custom_call.1} parent=0
    #allocation2 [shape = 'u8[16384]{0}', space=vmem, size = 0x4000, scoped, tag = 'output window, operand 0']
    #allocation3 [shape = 's32[2]{0}', space=sflag, size = 0x8, scoped, tag = 'scoped memory for tpu_custom_call.1']
    %8 = vsyncpa [#allocation3], 0
    %s9 = scalar_lea.sflag [#allocation3], 1
    %10 = vsyncpa %s9, 0
    loop: start=0, step=1, limit=4
    $region2: #{tpu_custom_call.1} parent=1 // loop_pre_header
      _
    $region3: #{tpu_custom_call.1} parent=1 // loop_header
      %s12 = sphi 0, %s16
      %p13 = scmp.ge.s32.totalorder %s12, 4
      %s19 = sphi 0, %s31
      %s20 = sphi 0, %s27
      %s21 = sphi 0, %s19
      %s22 = sphi 0, %s20
      %s23 = sphi 0, %s21
      %s24 = sphi 0, %s22
      %s36 = sphi 0, %s38
      %s39 = sphi 0, %s36
      %s40 = sphi 0, %s39
      %s56 = sphi 0, %s40
      %s60 = sphi 0, %s60
      %s62 = sphi 0, %s60
      %s63 = sphi 0, %s62
      %s77 = sphi 0, %s63
      %s81 = sphi 0, %s81
      %s83 = sphi 0, %s81
      %s84 = sphi 0, %s83
      %s98 = sphi 0, %s84
      %s106 = sphi 0, %s108
      %s109 = sphi 0, %s106
      %s110 = sphi 0, %s109
      %s126 = sphi 0, %s110
    $region4: #{tpu_custom_call.1} parent=1 // loop_header_branch
      %15 = sbr.rel (%p13) target = $region8
    $region5: #{tpu_custom_call.1} parent=1 // loop_body
      %s17 = ssub.s32 %s12, 1
      %s18 = ssub.s32 %s12, 2
      %s25 = sadd.s32 1, %s20
      %p26 = scmp.ge.s32.totalorder %s25, 1
      %s27 = scalar_select %p26, 0, %s25
      %s28 = sadd.s32 1, %s19
      %s29 = scalar_select %p26, %s28, %s19
      %p30 = scmp.ge.s32.totalorder %s29, 2
      %s31 = scalar_select %p30, 0, %s29
      %s32 = ssub.s32 %s19, %s31
      %s33 = ssub.s32 %s20, %s27
      %s34 = sor.u32 %s32, %s33
      %p35 = scmp.eq.s32.totalorder %s34, 0
      %s37 = sadd.s32 %s36, 1
      %s38 = scalar_select %p35, %s36, %s37
      %p41 = pneg %p35
      %p42 = scmp.eq.s32.totalorder %s12, 1
      %p43 = por %p41, %p42
      %p44 = scmp.ne.s32.totalorder %s36, %s39
      %p45 = scmp.eq.s32.totalorder %s12, 0
      %p46 = por %p44, %p45
      %p47 = scmp.ne.s32.totalorder %s36, %s39
      %p48 = scmp.eq.s32.totalorder %s17, 1
      %p49 = por %p47, %p48
      %p50 = scmp.ne.s32.totalorder %s39, %s40
      %p51 = scmp.eq.s32.totalorder %s17, 0
      %p52 = por %p50, %p51
      %p53 = scmp.ne.s32.totalorder %s39, %s40
      %p54 = scmp.eq.s32.totalorder %s18, 1
      %p55 = por %p53, %p54
      %p57 = scmp.ne.s32.totalorder %s40, %s56
      %p58 = scmp.eq.s32.totalorder %s18, 0
      %p59 = por %p57, %p58
      %s61 = sadd.s32 %s60, 1
      %p64 = scmp.eq.s32.totalorder %s12, 1
      %p65 = scmp.ne.s32.totalorder %s60, %s62
      %p66 = scmp.eq.s32.totalorder %s12, 0
      %p67 = por %p65, %p66
      %p68 = scmp.ne.s32.totalorder %s60, %s62
      %p69 = scmp.eq.s32.totalorder %s17, 1
      %p70 = por %p68, %p69
      %p71 = scmp.ne.s32.totalorder %s62, %s63
      %p72 = scmp.eq.s32.totalorder %s17, 0
      %p73 = por %p71, %p72
      %p74 = scmp.ne.s32.totalorder %s62, %s63
      %p75 = scmp.eq.s32.totalorder %s18, 1
      %p76 = por %p74, %p75
      %p78 = scmp.ne.s32.totalorder %s63, %s77
      %p79 = scmp.eq.s32.totalorder %s18, 0
      %p80 = por %p78, %p79
      %s82 = sadd.s32 %s81, 1
      %p85 = scmp.eq.s32.totalorder %s12, 1
      %p86 = scmp.ne.s32.totalorder %s81, %s83
      %p87 = scmp.eq.s32.totalorder %s12, 0
      %p88 = por %p86, %p87
      %p89 = scmp.ne.s32.totalorder %s81, %s83
      %p90 = scmp.eq.s32.totalorder %s17, 1
      %p91 = por %p89, %p90
      %p92 = scmp.ne.s32.totalorder %s83, %s84
      %p93 = scmp.eq.s32.totalorder %s17, 0
      %p94 = por %p92, %p93
      %p95 = scmp.ne.s32.totalorder %s83, %s84
      %p96 = scmp.eq.s32.totalorder %s18, 1
      %p97 = por %p95, %p96
      %p99 = scmp.ne.s32.totalorder %s84, %s98
      %p100 = scmp.eq.s32.totalorder %s18, 0
      %p101 = por %p99, %p100
      %s102 = ssub.s32 %s19, %s31
      %s103 = ssub.s32 %s20, %s27
      %s104 = sor.u32 %s102, %s103
      %p105 = scmp.eq.s32.totalorder %s104, 0
      %s107 = sadd.s32 %s106, 1
      %s108 = scalar_select %p105, %s106, %s107
      %p111 = pneg %p105
      %p112 = scmp.eq.s32.totalorder %s12, 1
      %p113 = por %p111, %p112
      %p114 = scmp.ne.s32.totalorder %s106, %s109
      %p115 = scmp.eq.s32.totalorder %s12, 0
      %p116 = por %p114, %p115
      %p117 = scmp.ne.s32.totalorder %s106, %s109
      %p118 = scmp.eq.s32.totalorder %s17, 1
      %p119 = por %p117, %p118
      %p120 = scmp.ne.s32.totalorder %s109, %s110
      %p121 = scmp.eq.s32.totalorder %s17, 0
      %p122 = por %p120, %p121
      %p123 = scmp.ne.s32.totalorder %s109, %s110
      %p124 = scmp.eq.s32.totalorder %s18, 1
      %p125 = por %p123, %p124
      %p127 = scmp.ne.s32.totalorder %s110, %s126
      %p128 = scmp.eq.s32.totalorder %s18, 0
      %p129 = por %p127, %p128
      %p130 = scmp.le.s32.totalorder 1, %s12
      %p131 = scmp.lt.s32.totalorder %s12, 3
      %p132 = pnand %p130, %p131
      %p133 = pneg %p132
      // Predicated region
      $region9: #{tpu_custom_call.1} parent=5 // pred_check
        _
      $region10: #{tpu_custom_call.1} parent=5 // pred_check_branch
        %135 = sbr.rel (%p132) target = $region12
      $region11: #{tpu_custom_call.1} parent=5 // pred_region
        %s136 = ssub.s32 %s12, 1
        // Predicated region
        $region13: #{tpu_custom_call.1} parent=11 // pred_check
          %p137 = pneg %p73
        $region14: #{tpu_custom_call.1} parent=11 // pred_check_branch
          %139 = sbr.rel (%p137) target = $region16
        $region15: #{tpu_custom_call.1} parent=11 // pred_region
          _
        $region16: #{tpu_custom_call.1} parent=11 // pred_fallthru
          _
        // Predicated region
        $region17: #{tpu_custom_call.1} parent=11 // pred_check
          %p140 = pneg %p94
        $region18: #{tpu_custom_call.1} parent=11 // pred_check_branch
          %142 = sbr.rel (%p140) target = $region20
        $region19: #{tpu_custom_call.1} parent=11 // pred_region
          _
        $region20: #{tpu_custom_call.1} parent=11 // pred_fallthru
          _
      $region12: #{tpu_custom_call.1} parent=5 // pred_fallthru
        _
      %p143 = scmp.lt.s32.totalorder %s12, 2
      // Predicated region
      $region21: #{tpu_custom_call.1} parent=5 // pred_check
        %p144 = pneg %p143
      $region22: #{tpu_custom_call.1} parent=5 // pred_check_branch
        %146 = sbr.rel (%p144) target = $region24
      $region23: #{tpu_custom_call.1} parent=5 // pred_region
        // Predicated region
        $region25: #{tpu_custom_call.1} parent=23 // pred_check
          %p147 = pneg %p46
        $region26: #{tpu_custom_call.1} parent=23 // pred_check_branch
          %149 = sbr.rel (%p147) target = $region28
        $region27: #{tpu_custom_call.1} parent=23 // pred_region
          %s150 = smul.u32 2, %s20
          %p151 = scmp.lt.s32.totalorder %s19, 1
          %s152 = scalar_select %p151, %s19, 1
          %p153 = scmp.lt.s32.totalorder %s150, 1
          %s154 = scalar_select %p153, %s150, 1
          %s155 = smul.addr %s152, 10
          %s156 = sadd.s32 %s154, %s155
          %s157 = smul.addr %s156, 4
          %s158 = scalar_lea.vmem %s0, %s157
          %s159 = smul.u32 2, %s20
        $region28: #{tpu_custom_call.1} parent=23 // pred_fallthru
          _
      $region24: #{tpu_custom_call.1} parent=5 // pred_fallthru
        _
      %p160 = scmp.le.s32.totalorder 1, %s12
      %p161 = scmp.lt.s32.totalorder %s12, 3
      %p162 = pnand %p160, %p161
      %p163 = pneg %p162
      // Predicated region
      $region29: #{tpu_custom_call.1} parent=5 // pred_check
        _
      $region30: #{tpu_custom_call.1} parent=5 // pred_check_branch
        %165 = sbr.rel (%p162) target = $region32
      $region31: #{tpu_custom_call.1} parent=5 // pred_region
        %s166 = ssub.s32 %s12, 1
        %s167 = smul.u32 2, %s22
        %p168 = scmp.lt.s32.totalorder %s21, 1
        %s169 = scalar_select %p168, %s21, 1
        %p170 = scmp.lt.s32.totalorder %s167, 1
        %s171 = scalar_select %p170, %s167, 1
        %s172 = smul.addr %s169, 10
        %s173 = sadd.s32 %s171, %s172
        %s174 = smul.addr %s173, 4
        %s175 = scalar_lea.vmem %s0, %s174
        %p176 = pneg %p52
        %p177 = pneg %p49
        %p178 = pneg %p73
        %p179 = pneg %p70
        %p180 = pneg %p94
        %p181 = pneg %p91
        %p182 = pneg %p122
        %p183 = pneg %p119
        %s184 = sand.u32 %s109, 1
        %s185 = scalar_lea.sflag [#allocation3], %s184
        %s186 = sand.u32 %s109, 1
        %s187 = smul.addr %s186, 16
        %s188 = scalar_lea.vmem [#allocation2], %s187
        %s189 = smul.u32 2, %s22
        %p190 = scmp.lt.s32.totalorder %s21, 1
        %s191 = scalar_select %p190, %s21, 1
        %p192 = scmp.lt.s32.totalorder %s189, 1
        %s193 = scalar_select %p192, %s189, 1
        %s194 = smul.addr %s191, 10
        %s195 = sadd.s32 %s193, %s194
        %s196 = smul.addr %s195, 4
        %s197 = scalar_lea.vmem %s0, %s196
        %s198 = smul.u32 2, %s22
        %s199 = smul.u32 2, %s22
        %v201 = vld [vmem:[%s1] sm:$0xf]
        %v202 = vld [vmem:[%s197] sm:$0xff]
        %v203 = vld [vmem:[%s197 + $0x8] sm:$0xff]
        %v204 = vld [vmem:[%s197 + $0x10] sm:$0xff]
        %v205 = vld [vmem:[%s197 + $0x18] sm:$0xff]
        %v206 = vld [vmem:[%s197 + $0x20] sm:$0x33]
        %v207 = vld [vmem:[%s2] sm:$0xff]
        %209 = vset.pattern.permute.xlu0 0
        %210 = vperm.xlu0 %209, %v207
        %v211 = vpop.permute.xlu0 %210
        %v218 = vunpack.c.l.b16 %v202
        %v219 = vunpack.c.h.b16 %v202
        %v220 = vunpack.c.l.b16 %v203
        %v221 = vunpack.c.h.b16 %v203
        %v222 = vunpack.c.l.b16 %v204
        %v223 = vunpack.c.h.b16 %v204
        %v224 = vunpack.c.l.b16 %v205
        %v225 = vunpack.c.h.b16 %v205
        %v226 = vunpack.c.l.b16 %v206
        %v227 = vunpack.c.h.b16 %v206
        %v228 = vpack.c.b16 %v220, %v218
        %v229 = vpack.c.b16 %v221, %v219
        %v230 = vpack.c.b16 %v224, %v222
        %v231 = vpack.c.b16 %v225, %v223
        %v232 = vpack.c.b16 %v226, %v226
        %v233 = vpack.c.b16 %v227, %v227
        %vm238 = vcmask 293888
        %v240 = vsel %vm238, %v201, 0
        %vm242 = vcmask 1041408
        %v244 = vsel %vm242, %v232, 0
        %v247 = vsel %vm242, %v233, 0
        %249 = vmatpush.bf16.msra.mxu0 0
        %250 = vmatpush.bf16.msra.mxu0 0
        %251 = vmatpush.bf16.msra.mxu0 0
        %252 = vmatpush.bf16.msra.mxu0 0
        %253 = vmatpush.bf16.msra.mxu0 0
        %254 = vmatpush.bf16.msra.mxu0 %v244
        %255 = vmatpush.bf16.msra.mxu0 %v230
        %256 = vmatpush.bf16.msra.mxu0 %v228
        %257 = vmatmul.bf16.gmra.mxu0 %v240
        %v258 = vpop.f32.mrf.mxu0
        %v259 = vadd.f32 %v211, %v258
        %v260 = vpop.f32.mrf.mxu0
        %261 = vdwg.mxu0
        %262 = vmatpush.bf16.msra.mxu0 0
        %263 = vmatpush.bf16.msra.mxu0 0
        %264 = vmatpush.bf16.msra.mxu0 0
        %265 = vmatpush.bf16.msra.mxu0 0
        %266 = vmatpush.bf16.msra.mxu0 0
        %267 = vmatpush.bf16.msra.mxu0 %v247
        %268 = vmatpush.bf16.msra.mxu0 %v231
        %269 = vmatpush.bf16.msra.mxu0 %v229
        %270 = vmatmul.bf16.gmra.mxu0 %v240
        %v271 = vpop.f32.mrf.mxu0
        %v272 = vadd.f32 %v211, %v271
        %v273 = vpop.f32.mrf.mxu0
        %274 = vdwg.mxu0
        %v275 = vmax.f32 %v259, 0.0
        %v276 = vmax.f32 %v272, 0.0
        %277 = vst [vmem:[%s188] sm:$0xff] %v275
        %278 = vst [vmem:[%s188 + $0x8] sm:$0xff] %v276
        %s279 = sand.u32 %s109, 1
        %s280 = scalar_lea.sflag [#allocation3], %s279
        %s281 = sand.u32 %s109, 1
        %s282 = smul.addr %s281, 16
        %s283 = scalar_lea.vmem [#allocation2], %s282
        // Predicated region
        $region33: #{tpu_custom_call.1} parent=31 // pred_check
          %p284 = pneg %p119
        $region34: #{tpu_custom_call.1} parent=31 // pred_check_branch
          %286 = sbr.rel (%p284) target = $region36
        $region35: #{tpu_custom_call.1} parent=31 // pred_region
          %s287 = smul.u32 2, %s22
          %289 = vsyncadd %s280, 0
          %s290 = smul.addr %s21, 2
          %s291 = sadd.s32 %s287, %s290
          %s292 = smul.addr %s291, 8
          %s293 = scalar_lea.hbm %s3, %s292
          %s295 = sshll.u32 %s283, 4
          %s296 = int_to_ptr.vmem [resolvable:$true] %s295
          %s297 = sshll.u32 %s293, 4
          %s298 = int_to_ptr.hbm [resolvable:$true] %s297
          %300 = dma.vmem_to_hbm [thread:$0]  %s296, 256, %s298, %s280
        $region36: #{tpu_custom_call.1} parent=31 // pred_fallthru
          _
      $region32: #{tpu_custom_call.1} parent=5 // pred_fallthru
        _
      %p301 = scmp.le.s32.totalorder 2, %s12
      // Predicated region
      $region37: #{tpu_custom_call.1} parent=5 // pred_check
        %p302 = pneg %p301
      $region38: #{tpu_custom_call.1} parent=5 // pred_check_branch
        %304 = sbr.rel (%p302) target = $region40
      $region39: #{tpu_custom_call.1} parent=5 // pred_region
        %s305 = ssub.s32 %s12, 2
        // Predicated region
        $region41: #{tpu_custom_call.1} parent=39 // pred_check
          %p306 = pneg %p125
        $region42: #{tpu_custom_call.1} parent=39 // pred_check_branch
          %308 = sbr.rel (%p306) target = $region44
        $region43: #{tpu_custom_call.1} parent=39 // pred_region
          %s309 = sand.u32 %s110, 1
          %s310 = scalar_lea.sflag [#allocation3], %s309
          %s311 = sand.u32 %s110, 1
          %s312 = smul.addr %s311, 16
          %s313 = scalar_lea.vmem [#allocation2], %s312
          %315 = dma.done %s310, 256
        $region44: #{tpu_custom_call.1} parent=39 // pred_fallthru
          _
      $region40: #{tpu_custom_call.1} parent=5 // pred_fallthru
        _
    $region6: #{tpu_custom_call.1} parent=1 // loop_footer
      %s16 = sadd.s32 1, %s12
    $region7: #{tpu_custom_call.1} parent=1 // loop_footer_branch
      %11 = sbr.rel target = $region3
    $region8: #{tpu_custom_call.1} parent=1 // loop_exit
      _
    %316 = vsyncpa [#allocation3], 1
    %s317 = scalar_lea.sflag [#allocation3], 1
    %318 = vsyncpa %s317, 1

</llo_original>
